<compile_context>
chip_gen: v7x
topology: tpu7x:2x2x1
jax: 0.10.0
libtpu: 0.0.40
codegen_flags: <defaults>
</compile_context>

<pallas_src>
import jax
import jax.numpy as jnp
from jax.experimental import pallas as pl
from jax.experimental.pallas import tpu as pltpu

HIDDEN_PAD = 128  # logical hidden width 64, padded to a full 128-lane vreg


# ---------------------------------------------------------------------------
# Kernel
# ---------------------------------------------------------------------------
def odefunc_kernel(t_ref, x_ref,
                   w1x_ref, w1t_ref, b1_ref,
                   w2_ref, b2_ref,
                   w3_ref, b3_ref,
                   w4_ref, b4_ref,
                   o_ref):
    t = t_ref[0]                                    # scalar (SMEM)
    # x arrives as f32; cast to bf16 on the VPU (cheap, hidden under the MXU)
    # so the HBM->VMEM DMA is a single f32 read with no wrapper-side cast op.
    x = x_ref[...].astype(jnp.bfloat16)             # (TB, F)

    # Layer 1:  concat([x, t]) @ W1 + b1  ==  x @ W1[:F] + (t * W1[F] + b1)
    h = jnp.dot(x, w1x_ref[...], preferred_element_type=jnp.float32)
    h = h + (t * w1t_ref[...] + b1_ref[...])        # bias path in f32 (v5e-safe)
    h = jnp.maximum(h, 0.0).astype(jnp.bfloat16)

    # Layer 2
    h = jnp.dot(h, w2_ref[...], preferred_element_type=jnp.float32)
    h = jnp.maximum(h + b2_ref[...], 0.0).astype(jnp.bfloat16)

    # Layer 3
    h = jnp.dot(h, w3_ref[...], preferred_element_type=jnp.float32)
    h = jnp.maximum(h + b3_ref[...], 0.0).astype(jnp.bfloat16)

    # Output layer (no activation)
    out = jnp.dot(h, w4_ref[...], preferred_element_type=jnp.float32)
    o_ref[...] = (out + b4_ref[...]).astype(o_ref.dtype)


# ---------------------------------------------------------------------------
# Wrapper
# ---------------------------------------------------------------------------
def _round_up(v, m):
    return -(-v // m) * m


def _choose_tile(B, tb_max):
    """Pick the batch tile: as large as possible (amortize the ~0.35 us/step
    fixed cost) while guaranteeing >= 2 grid steps whenever B allows, so both
    v7x TensorCores get work under dimension_semantics=("parallel",)."""
    if B <= 8:
        return B                                    # single tiny step
    tb = min(tb_max, B)
    if tb >= B:
        # Whole batch would fit in one step: split into exactly 2 parallel steps.
        tb = _round_up(max(8, (B + 1) // 2), 8)
    else:
        tb = max(8, (tb // 8) * 8)                  # sublane-aligned tile
    return tb


def _const_spec(shape):
    """Resident weight/bias operand: constant index_map + single buffer
    (it never changes across grid steps, so double-buffering is pure waste)."""
    idx = lambda i: (0, 0)
    try:
        return pl.BlockSpec(shape, idx, pipeline_mode=pl.Buffered(1))
    except Exception:  # older jax without pipeline_mode: default buffering
        return pl.BlockSpec(shape, idx)


def odefunc_forward(t, x, packed, *, tb_max=4096):
    """t: scalar time; x: (B, F) f32; packed: output of pack_params()."""
    w1x, w1t, b1, w2, b2, w3, b3, w4, b4 = packed
    B, F = x.shape
    H = w2.shape[0]
    out_dim = w4.shape[1]

    t_arr = jnp.asarray(t, jnp.float32).reshape((1,))

    tb = _choose_tile(B, tb_max)
    grid = (pl.cdiv(B, tb),)

    in_specs = [
        pl.BlockSpec(memory_space=pltpu.MemorySpace.SMEM),   # t (scalar)
        pl.BlockSpec((tb, F), lambda i: (i, 0)),             # x  (pipelined, f32)
        _const_spec((F, H)),                                 # W1 (x-feature rows)
        _const_spec((1, H)),                                 # W1 (time row)
        _const_spec((1, H)),                                 # b1
        _const_spec((H, H)),                                 # W2
        _const_spec((1, H)),                                 # b2
        _const_spec((H, H)),                                 # W3
        _const_spec((1, H)),                                 # b3
        _const_spec((H, out_dim)),                           # W4
        _const_spec((1, out_dim)),                           # b4
    ]
    out_spec = pl.BlockSpec((tb, out_dim), lambda i: (i, 0))

    # Advisory cost + explicit VMEM budget recomputed from tb.
    weight_bytes = (w1x.size + w2.size + w3.size + w4.size) * 2 \
                 + (w1t.size + b1.size + b2.size + b3.size + b4.size) * 4
    flops = 2 * B * (F * H + H * H + H * H + H * out_dim)
    bytes_accessed = B * F * 4 + B * out_dim * 4 + weight_bytes

    lane = lambda n: _round_up(n, 128)                  # VMEM lane padding
    vmem_limit = int(
        weight_bytes                                    # single-buffered constants
        + 2 * tb * lane(F) * 4                          # double-buffered x tiles
        + 2 * tb * lane(out_dim) * 4                    # double-buffered out tiles
        + 6 * tb * H * 4                                # live intermediates (generous)
        + (8 << 20)                                     # compiler scratch headroom
    )
    vmem_limit = min(vmem_limit, 48 << 20)              # stay inside v7x 64 MiB/TC

    return pl.pallas_call(
        odefunc_kernel,
        out_shape=jax.ShapeDtypeStruct((B, out_dim), jnp.float32),
        grid=grid,
        in_specs=in_specs,
        out_specs=out_spec,
        compiler_params=pltpu.CompilerParams(
            dimension_semantics=("parallel",),   # shard batch tiles across TCs (v7x)
            vmem_limit_bytes=vmem_limit,
        ),
        cost_estimate=pl.CostEstimate(
            flops=flops, transcendentals=0, bytes_accessed=bytes_accessed),
    )(t_arr, x, w1x, w1t, b1, w2, b2, w3, b3, w4, b4)


# ---------------------------------------------------------------------------
# Parameter construction / packing
# ---------------------------------------------------------------------------
def init_params(key, in_dim, out_dim, layer_widths=(64, 64, 64)):
    """torch.nn.Linear-style init; weights stored pre-transposed as (in, out)."""
    params = []
    dims = [in_dim] + list(layer_widths) + [out_dim]
    for i in range(len(dims) - 1):
        fan_in, fan_out = dims[i], dims[i + 1]
        key, kw, kb = jax.random.split(key, 3)
        bound = 1.0 / (fan_in ** 0.5)
        w_t = jax.random.uniform(kw, (fan_in, fan_out), jnp.float32, -bound, bound)
        b = jax.random.uniform(kb, (1, fan_out), jnp.float32, -bound, bound)
        params.append((w_t, b))
    return params


def pack_params(params, n_features, hidden_pad=HIDDEN_PAD):
    """One-time packing: split the time row of W1, zero-pad hidden 64->128,
    cast weights to bf16 (biases / time row stay f32)."""
    (w1, b1), (w2, b2), (w3, b3), (w4, b4) = params
    H = hidden_pad
    out_dim = w4.shape[1]

    def pad(a, shape):
        z = jnp.zeros(shape, a.dtype)
        return z.at[:a.shape[0], :a.shape[1]].set(a)

    w1x = pad(w1[:n_features], (n_features, H)).astype(jnp.bfloat16)
    w1t = pad(w1[n_features:n_features + 1], (1, H)).astype(jnp.float32)
    b1p = pad(b1, (1, H)).astype(jnp.float32)
    w2p = pad(w2, (H, H)).astype(jnp.bfloat16)
    b2p = pad(b2, (1, H)).astype(jnp.float32)
    w3p = pad(w3, (H, H)).astype(jnp.bfloat16)
    b3p = pad(b3, (1, H)).astype(jnp.float32)
    w4p = pad(w4, (H, out_dim)).astype(jnp.bfloat16)
    b4p = b4.astype(jnp.float32)
    return (w1x, w1t, b1p, w2p, b2p, w3p, b3p, w4p, b4p)


# ---------------------------------------------------------------------------
# References
# ---------------------------------------------------------------------------
def reference_f32(t, x, params):
    """Pure f32 ODEFuncWrapper forward (matches the PyTorch module)."""
    B = x.shape[0]
    h = jnp.concatenate([x, jnp.full((B, 1), t, x.dtype)], axis=-1)
    for i, (w_t, b) in enumerate(params):
        h = h @ w_t + b
        if i < len(params) - 1:
            h = jnp.maximum(h, 0.0)
    return h


def reference_matched(t, x, packed):
    """Reference mirroring the kernel's bf16-weight / f32-accumulate path."""
    w1x, w1t, b1, w2, b2, w3, b3, w4, b4 = packed
    f = lambda a: a.astype(jnp.float32)
    h = f(x.astype(jnp.bfloat16)) @ f(w1x) + t * w1t + b1
    h = f(jnp.maximum(h, 0.0).astype(jnp.bfloat16))
    h = h @ f(w2) + b2
    h = f(jnp.maximum(h, 0.0).astype(jnp.bfloat16))
    h = h @ f(w3) + b3
    h = f(jnp.maximum(h, 0.0).astype(jnp.bfloat16))
    return h @ f(w4) + b4


# ---------------------------------------------------------------------------
if __name__ == "__main__":
    key = jax.random.PRNGKey(0)
    n_features = 16                  # flow maps F+1 -> F

    key, kp = jax.random.split(key)
    params = init_params(kp, in_dim=n_features + 1, out_dim=n_features)
    packed = pack_params(params, n_features)

    # B=64: even split into 2 parallel tiles.  B=37: B % tb != 0 and B % 8 != 0,
    # exercising the OOB-masked last tile (review correctness concern #2).
    for B in (64, 37):
        key, kx, kt = jax.random.split(key, 3)
        x = jax.random.normal(kx, (B, n_features), jnp.float32)
        t = jax.random.uniform(kt, (), jnp.float32)   # scalar time, as in ODEFuncWrapper

        out = jax.block_until_ready(odefunc_forward(t, x, packed))
        assert out.shape == (B, n_features), out.shape

        # Tight check vs a reference using the identical bf16/f32 mixed path.
        ref_m = reference_matched(t, x, packed)
        assert jnp.allclose(out, ref_m, atol=1e-4, rtol=1e-4), \
            f"mismatch vs matched reference (B={B})"

        # Looser check vs the pure-f32 module semantics (bf16 weight rounding only).
        ref = reference_f32(t, x, params)
        assert jnp.allclose(out, ref, atol=5e-2, rtol=5e-2), \
            f"mismatch vs f32 reference (B={B})"

    print("KERNEL_OK")
</pallas_src>

<mosaic_0001>
module attributes {stable_mosaic.version = 11 : i64} {
  func.func @odefunc_kernel(%arg0: i32, %arg1: memref<1xf32, #tpu.memory_space<smem>>, %arg2: memref<32x16xf32, #tpu.memory_space<vmem>>, %arg3: memref<16x128xbf16, #tpu.memory_space<vmem>>, %arg4: memref<1x128xf32, #tpu.memory_space<vmem>>, %arg5: memref<1x128xf32, #tpu.memory_space<vmem>>, %arg6: memref<128x128xbf16, #tpu.memory_space<vmem>>, %arg7: memref<1x128xf32, #tpu.memory_space<vmem>>, %arg8: memref<128x128xbf16, #tpu.memory_space<vmem>>, %arg9: memref<1x128xf32, #tpu.memory_space<vmem>>, %arg10: memref<128x16xbf16, #tpu.memory_space<vmem>>, %arg11: memref<1x16xf32, #tpu.memory_space<vmem>>, %arg12: memref<32x16xf32, #tpu.memory_space<vmem>>) attributes {dimension_semantics = [#tpu.dimension_semantics<parallel>], iteration_bounds = array<i64: 2>, scalar_prefetch = 0 : i64, scratch_operands = 0 : i64, tpu.core_type = #tpu.core_type<tc>, window_params = [{transform_indices = @transform_0, window_bounds = array<i64: 1>}, {transform_indices = @transform_1, window_bounds = array<i64: 32, 16>}, {pipeline_mode = #tpu.pipeline_mode<synchronous>, transform_indices = @transform_2, window_bounds = array<i64: 16, 128>}, {pipeline_mode = #tpu.pipeline_mode<synchronous>, transform_indices = @transform_3, window_bounds = array<i64: 1, 128>}, {pipeline_mode = #tpu.pipeline_mode<synchronous>, transform_indices = @transform_4, window_bounds = array<i64: 1, 128>}, {pipeline_mode = #tpu.pipeline_mode<synchronous>, transform_indices = @transform_5, window_bounds = array<i64: 128, 128>}, {pipeline_mode = #tpu.pipeline_mode<synchronous>, transform_indices = @transform_6, window_bounds = array<i64: 1, 128>}, {pipeline_mode = #tpu.pipeline_mode<synchronous>, transform_indices = @transform_7, window_bounds = array<i64: 128, 128>}, {pipeline_mode = #tpu.pipeline_mode<synchronous>, transform_indices = @transform_8, window_bounds = array<i64: 1, 128>}, {pipeline_mode = #tpu.pipeline_mode<synchronous>, transform_indices = @transform_9, window_bounds = array<i64: 128, 16>}, {pipeline_mode = #tpu.pipeline_mode<synchronous>, transform_indices = @transform_10, window_bounds = array<i64: 1, 16>}, {transform_indices = @transform_11, window_bounds = array<i64: 32, 16>}]} {
    %c0 = arith.constant 0 : index
    %0 = memref.load %arg1[%c0] : memref<1xf32, #tpu.memory_space<smem>>
    %c0_0 = arith.constant 0 : index
    %c0_1 = arith.constant 0 : index
    %1 = vector.load %arg2[%c0_0, %c0_1] : memref<32x16xf32, #tpu.memory_space<vmem>>, vector<32x16xf32>
    %2 = arith.truncf %1 : vector<32x16xf32> to vector<32x16xbf16>
    %c0_2 = arith.constant 0 : index
    %c0_3 = arith.constant 0 : index
    %3 = vector.load %arg3[%c0_2, %c0_3] : memref<16x128xbf16, #tpu.memory_space<vmem>>, vector<16x128xbf16>
    %cst = arith.constant dense<0.000000e+00> : vector<32x128xf32>
    %4 = tpu.matmul %2, %3, %cst {dimension_numbers = #tpu.dot_dimension_numbers<[1], [0], [0], [1], [0, 0, 1, 1], [], []>} : vector<32x16xbf16>, vector<16x128xbf16>, vector<32x128xf32> -> vector<32x128xf32>
    %c0_4 = arith.constant 0 : index
    %c0_5 = arith.constant 0 : index
    %5 = vector.load %arg4[%c0_4, %c0_5] : memref<1x128xf32, #tpu.memory_space<vmem>>, vector<1x128xf32>
    %6 = vector.broadcast %0 : f32 to vector<1x128xf32>
    %7 = arith.mulf %6, %5 : vector<1x128xf32>
    %c0_6 = arith.constant 0 : index
    %c0_7 = arith.constant 0 : index
    %8 = vector.load %arg5[%c0_6, %c0_7] : memref<1x128xf32, #tpu.memory_space<vmem>>, vector<1x128xf32>
    %9 = arith.addf %7, %8 : vector<1x128xf32>
    %10 = vector.broadcast %9 : vector<1x128xf32> to vector<32x128xf32>
    %11 = arith.addf %4, %10 : vector<32x128xf32>
    %cst_8 = arith.constant 0.000000e+00 : f32
    %12 = vector.broadcast %cst_8 : f32 to vector<32x128xf32>
    %13 = arith.maximumf %11, %12 : vector<32x128xf32>
    %14 = arith.truncf %13 : vector<32x128xf32> to vector<32x128xbf16>
    %c0_9 = arith.constant 0 : index
    %c0_10 = arith.constant 0 : index
    %15 = vector.load %arg6[%c0_9, %c0_10] : memref<128x128xbf16, #tpu.memory_space<vmem>>, vector<128x128xbf16>
    %cst_11 = arith.constant dense<0.000000e+00> : vector<32x128xf32>
    %16 = tpu.matmul %14, %15, %cst_11 {dimension_numbers = #tpu.dot_dimension_numbers<[1], [0], [0], [1], [0, 0, 1, 1], [], []>} : vector<32x128xbf16>, vector<128x128xbf16>, vector<32x128xf32> -> vector<32x128xf32>
    %c0_12 = arith.constant 0 : index
    %c0_13 = arith.constant 0 : index
    %17 = vector.load %arg7[%c0_12, %c0_13] : memref<1x128xf32, #tpu.memory_space<vmem>>, vector<1x128xf32>
    %18 = vector.broadcast %17 : vector<1x128xf32> to vector<32x128xf32>
    %19 = arith.addf %16, %18 : vector<32x128xf32>
    %cst_14 = arith.constant 0.000000e+00 : f32
    %20 = vector.broadcast %cst_14 : f32 to vector<32x128xf32>
    %21 = arith.maximumf %19, %20 : vector<32x128xf32>
    %22 = arith.truncf %21 : vector<32x128xf32> to vector<32x128xbf16>
    %c0_15 = arith.constant 0 : index
    %c0_16 = arith.constant 0 : index
    %23 = vector.load %arg8[%c0_15, %c0_16] : memref<128x128xbf16, #tpu.memory_space<vmem>>, vector<128x128xbf16>
    %cst_17 = arith.constant dense<0.000000e+00> : vector<32x128xf32>
    %24 = tpu.matmul %22, %23, %cst_17 {dimension_numbers = #tpu.dot_dimension_numbers<[1], [0], [0], [1], [0, 0, 1, 1], [], []>} : vector<32x128xbf16>, vector<128x128xbf16>, vector<32x128xf32> -> vector<32x128xf32>
    %c0_18 = arith.constant 0 : index
    %c0_19 = arith.constant 0 : index
    %25 = vector.load %arg9[%c0_18, %c0_19] : memref<1x128xf32, #tpu.memory_space<vmem>>, vector<1x128xf32>
    %26 = vector.broadcast %25 : vector<1x128xf32> to vector<32x128xf32>
    %27 = arith.addf %24, %26 : vector<32x128xf32>
    %cst_20 = arith.constant 0.000000e+00 : f32
    %28 = vector.broadcast %cst_20 : f32 to vector<32x128xf32>
    %29 = arith.maximumf %27, %28 : vector<32x128xf32>
    %30 = arith.truncf %29 : vector<32x128xf32> to vector<32x128xbf16>
    %c0_21 = arith.constant 0 : index
    %c0_22 = arith.constant 0 : index
    %31 = vector.load %arg10[%c0_21, %c0_22] : memref<128x16xbf16, #tpu.memory_space<vmem>>, vector<128x16xbf16>
    %cst_23 = arith.constant dense<0.000000e+00> : vector<32x16xf32>
    %32 = tpu.matmul %30, %31, %cst_23 {dimension_numbers = #tpu.dot_dimension_numbers<[1], [0], [0], [1], [0, 0, 1, 1], [], []>} : vector<32x128xbf16>, vector<128x16xbf16>, vector<32x16xf32> -> vector<32x16xf32>
    %c0_24 = arith.constant 0 : index
    %c0_25 = arith.constant 0 : index
    %33 = vector.load %arg11[%c0_24, %c0_25] : memref<1x16xf32, #tpu.memory_space<vmem>>, vector<1x16xf32>
    %34 = vector.broadcast %33 : vector<1x16xf32> to vector<32x16xf32>
    %35 = arith.addf %32, %34 : vector<32x16xf32>
    %c0_26 = arith.constant 0 : index
    %c0_27 = arith.constant 0 : index
    %36 = vector.load %arg12[%c0_26, %c0_27] : memref<32x16xf32, #tpu.memory_space<vmem>>, vector<32x16xf32>
    tpu.vector_store %arg12[%c0_26, %c0_27], %35 {strides = array<i32>} : memref<32x16xf32, #tpu.memory_space<vmem>>, vector<32x16xf32>,
    return
  }
  func.func @transform_0(%arg0: i32) -> i32 {
    %c0_i32 = arith.constant 0 : i32
    %c0_i32_0 = arith.constant 0 : i32
    return %c0_i32 : i32
  }
  func.func @transform_1(%arg0: i32) -> (i32, i32) {
    %c0_i32 = arith.constant 0 : i32
    %c0_i32_0 = arith.constant 0 : i32
    return %arg0, %c0_i32 : i32, i32
  }
  func.func @transform_2(%arg0: i32) -> (i32, i32) {
    %c0_i32 = arith.constant 0 : i32
    %c0_i32_0 = arith.constant 0 : i32
    %c0_i32_1 = arith.constant 0 : i32
    return %c0_i32, %c0_i32_0 : i32, i32
  }
  func.func @transform_3(%arg0: i32) -> (i32, i32) {
    %c0_i32 = arith.constant 0 : i32
    %c0_i32_0 = arith.constant 0 : i32
    %c0_i32_1 = arith.constant 0 : i32
    return %c0_i32, %c0_i32_0 : i32, i32
  }
  func.func @transform_4(%arg0: i32) -> (i32, i32) {
    %c0_i32 = arith.constant 0 : i32
    %c0_i32_0 = arith.constant 0 : i32
    %c0_i32_1 = arith.constant 0 : i32
    return %c0_i32, %c0_i32_0 : i32, i32
  }
  func.func @transform_5(%arg0: i32) -> (i32, i32) {
    %c0_i32 = arith.constant 0 : i32
    %c0_i32_0 = arith.constant 0 : i32
    %c0_i32_1 = arith.constant 0 : i32
    return %c0_i32, %c0_i32_0 : i32, i32
  }
  func.func @transform_6(%arg0: i32) -> (i32, i32) {
    %c0_i32 = arith.constant 0 : i32
    %c0_i32_0 = arith.constant 0 : i32
    %c0_i32_1 = arith.constant 0 : i32
    return %c0_i32, %c0_i32_0 : i32, i32
  }
  func.func @transform_7(%arg0: i32) -> (i32, i32) {
    %c0_i32 = arith.constant 0 : i32
    %c0_i32_0 = arith.constant 0 : i32
    %c0_i32_1 = arith.constant 0 : i32
    return %c0_i32, %c0_i32_0 : i32, i32
  }
  func.func @transform_8(%arg0: i32) -> (i32, i32) {
    %c0_i32 = arith.constant 0 : i32
    %c0_i32_0 = arith.constant 0 : i32
    %c0_i32_1 = arith.constant 0 : i32
    return %c0_i32, %c0_i32_0 : i32, i32
  }
  func.func @transform_9(%arg0: i32) -> (i32, i32) {
    %c0_i32 = arith.constant 0 : i32
    %c0_i32_0 = arith.constant 0 : i32
    %c0_i32_1 = arith.constant 0 : i32
    return %c0_i32, %c0_i32_0 : i32, i32
  }
  func.func @transform_10(%arg0: i32) -> (i32, i32) {
    %c0_i32 = arith.constant 0 : i32
    %c0_i32_0 = arith.constant 0 : i32
    %c0_i32_1 = arith.constant 0 : i32
    return %c0_i32, %c0_i32_0 : i32, i32
  }
  func.func @transform_11(%arg0: i32) -> (i32, i32) {
    %c0_i32 = arith.constant 0 : i32
    %c0_i32_0 = arith.constant 0 : i32
    return %arg0, %c0_i32 : i32, i32
  }
}

</mosaic_0001>

<llo_original>
// kernel: tpu_custom_call.1
$region0: #{tpu_custom_call.1}
  #allocation0 [shape = 'u32[]', space=smem, size = 0x4, offset = 0x4, fixed_abs, tag = 'smem constant byte address 0x4 - core index']
  #allocation1 [shape = 'u32[144,128]{1,0:T(1,128)}', space=vmem, size = 0x12000, scoped, tag = 'internal scratch']
  #allocation2 [shape = 'f32[1]{0:T(128)S(6)}', space=smem, size = 0x200, scoped, tag = 'scoped memory for tpu_custom_call.1']
  %s0 = inlined_call_operand.<no memory space> [shape: f32[1], index: 0, kind: input, shape index: {}]
  %s1 = inlined_call_operand.vmem [shape: f32[64,16], index: 1, kind: input, shape index: {}]
  %s2 = inlined_call_operand.vmem [shape: bf16[16,128], index: 2, kind: input, shape index: {}]
  %s3 = inlined_call_operand.vmem [shape: f32[1,128], index: 3, kind: input, shape index: {}]
  %s4 = inlined_call_operand.vmem [shape: f32[1,128], index: 4, kind: input, shape index: {}]
  %s5 = inlined_call_operand.vmem [shape: bf16[128,128], index: 5, kind: input, shape index: {}]
  %s6 = inlined_call_operand.vmem [shape: f32[1,128], index: 6, kind: input, shape index: {}]
  %s7 = inlined_call_operand.vmem [shape: bf16[128,128], index: 7, kind: input, shape index: {}]
  %s8 = inlined_call_operand.vmem [shape: f32[1,128], index: 8, kind: input, shape index: {}]
  %s9 = inlined_call_operand.vmem [shape: bf16[128,16], index: 9, kind: input, shape index: {}]
  %s10 = inlined_call_operand.vmem [shape: f32[1,16], index: 10, kind: input, shape index: {}]
  %s11 = inlined_call_operand.vmem [shape: f32[64,16], index: 11, kind: output, shape index: {}]
  %s12 = sld [smem:[#allocation0]]
  $region77: #{tpu_custom_call.1} parent=0
    _
  %s14 = ssub.s32 1, %s12
  %s15 = scalar_select 0, %s14, %s12
  %16 = sst [smem:[#allocation2]] %s0
  loop: start=0, step=1, limit=4
  $region2: #{tpu_custom_call.1} parent=0 // loop_pre_header
    _
  $region3: #{tpu_custom_call.1} parent=0 // loop_header
    %s18 = sphi 0, %s22
    %p19 = scmp.ge.s32.totalorder %s18, 4
    %s26 = sphi 0, %s26
    %s28 = sphi 0, %s26
    %s29 = sphi 0, %s28
    %s43 = sphi 0, %s29
    %s49 = sphi 0, %s51
    %s52 = sphi 0, %s49
    %s53 = sphi 0, %s52
    %s69 = sphi 0, %s53
    %s73 = sphi 0, %s73
    %s75 = sphi 0, %s73
    %s76 = sphi 0, %s75
    %s90 = sphi 0, %s76
    %s94 = sphi 0, %s94
    %s96 = sphi 0, %s94
    %s97 = sphi 0, %s96
    %s111 = sphi 0, %s97
    %s115 = sphi 0, %s115
    %s117 = sphi 0, %s115
    %s118 = sphi 0, %s117
    %s132 = sphi 0, %s118
    %s136 = sphi 0, %s136
    %s138 = sphi 0, %s136
    %s139 = sphi 0, %s138
    %s153 = sphi 0, %s139
    %s157 = sphi 0, %s157
    %s159 = sphi 0, %s157
    %s160 = sphi 0, %s159
    %s174 = sphi 0, %s160
    %s178 = sphi 0, %s178
    %s180 = sphi 0, %s178
    %s181 = sphi 0, %s180
    %s195 = sphi 0, %s181
    %s199 = sphi 0, %s199
    %s201 = sphi 0, %s199
    %s202 = sphi 0, %s201
    %s216 = sphi 0, %s202
    %s220 = sphi 0, %s220
    %s222 = sphi 0, %s220
    %s223 = sphi 0, %s222
    %s237 = sphi 0, %s223
    %s241 = sphi 0, %s241
    %s243 = sphi 0, %s241
    %s244 = sphi 0, %s243
    %s258 = sphi 0, %s244
    %s264 = sphi 0, %s266
    %s267 = sphi 0, %s264
    %s268 = sphi 0, %s267
    %s284 = sphi 0, %s268
  $region4: #{tpu_custom_call.1} parent=0 // loop_header_branch
    %21 = sbr.rel (%p19) target = $region8
  $region5: #{tpu_custom_call.1} parent=0 // loop_body
    %s23 = ssub.s32 %s18, 1
    %s24 = ssub.s32 %s18, 2
    %s25 = sadd.s32 %s18, 1
    %s27 = sadd.s32 %s26, 1
    %p30 = scmp.eq.s32.totalorder %s18, 1
    %p31 = scmp.ne.s32.totalorder %s26, %s28
    %p32 = scmp.eq.s32.totalorder %s18, 0
    %p33 = por %p31, %p32
    %p34 = scmp.ne.s32.totalorder %s26, %s28
    %p35 = scmp.eq.s32.totalorder %s23, 1
    %p36 = por %p34, %p35
    %p37 = scmp.ne.s32.totalorder %s28, %s29
    %p38 = scmp.eq.s32.totalorder %s23, 0
    %p39 = por %p37, %p38
    %p40 = scmp.ne.s32.totalorder %s28, %s29
    %p41 = scmp.eq.s32.totalorder %s24, 1
    %p42 = por %p40, %p41
    %p44 = scmp.ne.s32.totalorder %s29, %s43
    %p45 = scmp.eq.s32.totalorder %s24, 0
    %p46 = por %p44, %p45
    %s47 = ssub.s32 %s18, %s25
    %p48 = scmp.eq.s32.totalorder %s47, 0
    %s50 = sadd.s32 %s49, 1
    %s51 = scalar_select %p48, %s49, %s50
    %p54 = pneg %p48
    %p55 = scmp.eq.s32.totalorder %s18, 1
    %p56 = por %p54, %p55
    %p57 = scmp.ne.s32.totalorder %s49, %s52
    %p58 = scmp.eq.s32.totalorder %s18, 0
    %p59 = por %p57, %p58
    %p60 = scmp.ne.s32.totalorder %s49, %s52
    %p61 = scmp.eq.s32.totalorder %s23, 1
    %p62 = por %p60, %p61
    %p63 = scmp.ne.s32.totalorder %s52, %s53
    %p64 = scmp.eq.s32.totalorder %s23, 0
    %p65 = por %p63, %p64
    %p66 = scmp.ne.s32.totalorder %s52, %s53
    %p67 = scmp.eq.s32.totalorder %s24, 1
    %p68 = por %p66, %p67
    %p70 = scmp.ne.s32.totalorder %s53, %s69
    %p71 = scmp.eq.s32.totalorder %s24, 0
    %p72 = por %p70, %p71
    %s74 = sadd.s32 %s73, 1
    %p77 = scmp.eq.s32.totalorder %s18, 1
    %p78 = scmp.ne.s32.totalorder %s73, %s75
    %p79 = scmp.eq.s32.totalorder %s18, 0
    %p80 = por %p78, %p79
    %p81 = scmp.ne.s32.totalorder %s73, %s75
    %p82 = scmp.eq.s32.totalorder %s23, 1
    %p83 = por %p81, %p82
    %p84 = scmp.ne.s32.totalorder %s75, %s76
    %p85 = scmp.eq.s32.totalorder %s23, 0
    %p86 = por %p84, %p85
    %p87 = scmp.ne.s32.totalorder %s75, %s76
    %p88 = scmp.eq.s32.totalorder %s24, 1
    %p89 = por %p87, %p88
    %p91 = scmp.ne.s32.totalorder %s76, %s90
    %p92 = scmp.eq.s32.totalorder %s24, 0
    %p93 = por %p91, %p92
    %s95 = sadd.s32 %s94, 1
    %p98 = scmp.eq.s32.totalorder %s18, 1
    %p99 = scmp.ne.s32.totalorder %s94, %s96
    %p100 = scmp.eq.s32.totalorder %s18, 0
    %p101 = por %p99, %p100
    %p102 = scmp.ne.s32.totalorder %s94, %s96
    %p103 = scmp.eq.s32.totalorder %s23, 1
    %p104 = por %p102, %p103
    %p105 = scmp.ne.s32.totalorder %s96, %s97
    %p106 = scmp.eq.s32.totalorder %s23, 0
    %p107 = por %p105, %p106
    %p108 = scmp.ne.s32.totalorder %s96, %s97
    %p109 = scmp.eq.s32.totalorder %s24, 1
    %p110 = por %p108, %p109
    %p112 = scmp.ne.s32.totalorder %s97, %s111
    %p113 = scmp.eq.s32.totalorder %s24, 0
    %p114 = por %p112, %p113
    %s116 = sadd.s32 %s115, 1
    %p119 = scmp.eq.s32.totalorder %s18, 1
    %p120 = scmp.ne.s32.totalorder %s115, %s117
    %p121 = scmp.eq.s32.totalorder %s18, 0
    %p122 = por %p120, %p121
    %p123 = scmp.ne.s32.totalorder %s115, %s117
    %p124 = scmp.eq.s32.totalorder %s23, 1
    %p125 = por %p123, %p124
    %p126 = scmp.ne.s32.totalorder %s117, %s118
    %p127 = scmp.eq.s32.totalorder %s23, 0
    %p128 = por %p126, %p127
    %p129 = scmp.ne.s32.totalorder %s117, %s118
    %p130 = scmp.eq.s32.totalorder %s24, 1
    %p131 = por %p129, %p130
    %p133 = scmp.ne.s32.totalorder %s118, %s132
    %p134 = scmp.eq.s32.totalorder %s24, 0
    %p135 = por %p133, %p134
    %s137 = sadd.s32 %s136, 1
    %p140 = scmp.eq.s32.totalorder %s18, 1
    %p141 = scmp.ne.s32.totalorder %s136, %s138
    %p142 = scmp.eq.s32.totalorder %s18, 0
    %p143 = por %p141, %p142
    %p144 = scmp.ne.s32.totalorder %s136, %s138
    %p145 = scmp.eq.s32.totalorder %s23, 1
    %p146 = por %p144, %p145
    %p147 = scmp.ne.s32.totalorder %s138, %s139
    %p148 = scmp.eq.s32.totalorder %s23, 0
    %p149 = por %p147, %p148
    %p150 = scmp.ne.s32.totalorder %s138, %s139
    %p151 = scmp.eq.s32.totalorder %s24, 1
    %p152 = por %p150, %p151
    %p154 = scmp.ne.s32.totalorder %s139, %s153
    %p155 = scmp.eq.s32.totalorder %s24, 0
    %p156 = por %p154, %p155
    %s158 = sadd.s32 %s157, 1
    %p161 = scmp.eq.s32.totalorder %s18, 1
    %p162 = scmp.ne.s32.totalorder %s157, %s159
    %p163 = scmp.eq.s32.totalorder %s18, 0
    %p164 = por %p162, %p163
    %p165 = scmp.ne.s32.totalorder %s157, %s159
    %p166 = scmp.eq.s32.totalorder %s23, 1
    %p167 = por %p165, %p166
    %p168 = scmp.ne.s32.totalorder %s159, %s160
    %p169 = scmp.eq.s32.totalorder %s23, 0
    %p170 = por %p168, %p169
    %p171 = scmp.ne.s32.totalorder %s159, %s160
    %p172 = scmp.eq.s32.totalorder %s24, 1
    %p173 = por %p171, %p172
    %p175 = scmp.ne.s32.totalorder %s160, %s174
    %p176 = scmp.eq.s32.totalorder %s24, 0
    %p177 = por %p175, %p176
    %s179 = sadd.s32 %s178, 1
    %p182 = scmp.eq.s32.totalorder %s18, 1
    %p183 = scmp.ne.s32.totalorder %s178, %s180
    %p184 = scmp.eq.s32.totalorder %s18, 0
    %p185 = por %p183, %p184
    %p186 = scmp.ne.s32.totalorder %s178, %s180
    %p187 = scmp.eq.s32.totalorder %s23, 1
    %p188 = por %p186, %p187
    %p189 = scmp.ne.s32.totalorder %s180, %s181
    %p190 = scmp.eq.s32.totalorder %s23, 0
    %p191 = por %p189, %p190
    %p192 = scmp.ne.s32.totalorder %s180, %s181
    %p193 = scmp.eq.s32.totalorder %s24, 1
    %p194 = por %p192, %p193
    %p196 = scmp.ne.s32.totalorder %s181, %s195
    %p197 = scmp.eq.s32.totalorder %s24, 0
    %p198 = por %p196, %p197
    %s200 = sadd.s32 %s199, 1
    %p203 = scmp.eq.s32.totalorder %s18, 1
    %p204 = scmp.ne.s32.totalorder %s199, %s201
    %p205 = scmp.eq.s32.totalorder %s18, 0
    %p206 = por %p204, %p205
    %p207 = scmp.ne.s32.totalorder %s199, %s201
    %p208 = scmp.eq.s32.totalorder %s23, 1
    %p209 = por %p207, %p208
    %p210 = scmp.ne.s32.totalorder %s201, %s202
    %p211 = scmp.eq.s32.totalorder %s23, 0
    %p212 = por %p210, %p211
    %p213 = scmp.ne.s32.totalorder %s201, %s202
    %p214 = scmp.eq.s32.totalorder %s24, 1
    %p215 = por %p213, %p214
    %p217 = scmp.ne.s32.totalorder %s202, %s216
    %p218 = scmp.eq.s32.totalorder %s24, 0
    %p219 = por %p217, %p218
    %s221 = sadd.s32 %s220, 1
    %p224 = scmp.eq.s32.totalorder %s18, 1
    %p225 = scmp.ne.s32.totalorder %s220, %s222
    %p226 = scmp.eq.s32.totalorder %s18, 0
    %p227 = por %p225, %p226
    %p228 = scmp.ne.s32.totalorder %s220, %s222
    %p229 = scmp.eq.s32.totalorder %s23, 1
    %p230 = por %p228, %p229
    %p231 = scmp.ne.s32.totalorder %s222, %s223
    %p232 = scmp.eq.s32.totalorder %s23, 0
    %p233 = por %p231, %p232
    %p234 = scmp.ne.s32.totalorder %s222, %s223
    %p235 = scmp.eq.s32.totalorder %s24, 1
    %p236 = por %p234, %p235
    %p238 = scmp.ne.s32.totalorder %s223, %s237
    %p239 = scmp.eq.s32.totalorder %s24, 0
    %p240 = por %p238, %p239
    %s242 = sadd.s32 %s241, 1
    %p245 = scmp.eq.s32.totalorder %s18, 1
    %p246 = scmp.ne.s32.totalorder %s241, %s243
    %p247 = scmp.eq.s32.totalorder %s18, 0
    %p248 = por %p246, %p247
    %p249 = scmp.ne.s32.totalorder %s241, %s243
    %p250 = scmp.eq.s32.totalorder %s23, 1
    %p251 = por %p249, %p250
    %p252 = scmp.ne.s32.totalorder %s243, %s244
    %p253 = scmp.eq.s32.totalorder %s23, 0
    %p254 = por %p252, %p253
    %p255 = scmp.ne.s32.totalorder %s243, %s244
    %p256 = scmp.eq.s32.totalorder %s24, 1
    %p257 = por %p255, %p256
    %p259 = scmp.ne.s32.totalorder %s244, %s258
    %p260 = scmp.eq.s32.totalorder %s24, 0
    %p261 = por %p259, %p260
    %s262 = ssub.s32 %s18, %s25
    %p263 = scmp.eq.s32.totalorder %s262, 0
    %s265 = sadd.s32 %s264, 1
    %s266 = scalar_select %p263, %s264, %s265
    %p269 = pneg %p263
    %p270 = scmp.eq.s32.totalorder %s18, 1
    %p271 = por %p269, %p270
    %p272 = scmp.ne.s32.totalorder %s264, %s267
    %p273 = scmp.eq.s32.totalorder %s18, 0
    %p274 = por %p272, %p273
    %p275 = scmp.ne.s32.totalorder %s264, %s267
    %p276 = scmp.eq.s32.totalorder %s23, 1
    %p277 = por %p275, %p276
    %p278 = scmp.ne.s32.totalorder %s267, %s268
    %p279 = scmp.eq.s32.totalorder %s23, 0
    %p280 = por %p278, %p279
    %p281 = scmp.ne.s32.totalorder %s267, %s268
    %p282 = scmp.eq.s32.totalorder %s24, 1
    %p283 = por %p281, %p282
    %p285 = scmp.ne.s32.totalorder %s268, %s284
    %p286 = scmp.eq.s32.totalorder %s24, 0
    %p287 = por %p285, %p286
    %p288 = scmp.le.s32.totalorder 1, %s18
    %p289 = scmp.lt.s32.totalorder %s18, 3
    %p290 = pnand %p288, %p289
    %p291 = pneg %p290
    // Predicated region
    $region9: #{tpu_custom_call.1} parent=5 // pred_check
      _
    $region10: #{tpu_custom_call.1} parent=5 // pred_check_branch
      %293 = sbr.rel (%p290) target = $region12
    $region11: #{tpu_custom_call.1} parent=5 // pred_region
      %s294 = ssub.s32 %s18, 1
      // Predicated region
      $region13: #{tpu_custom_call.1} parent=11 // pred_check
        %p295 = pneg %p39
      $region14: #{tpu_custom_call.1} parent=11 // pred_check_branch
        %297 = sbr.rel (%p295) target = $region16
      $region15: #{tpu_custom_call.1} parent=11 // pred_region
        _
      $region16: #{tpu_custom_call.1} parent=11 // pred_fallthru
        _
      // Predicated region
      $region17: #{tpu_custom_call.1} parent=11 // pred_check
        %p298 = pneg %p86
      $region18: #{tpu_custom_call.1} parent=11 // pred_check_branch
        %300 = sbr.rel (%p298) target = $region20
      $region19: #{tpu_custom_call.1} parent=11 // pred_region
        _
      $region20: #{tpu_custom_call.1} parent=11 // pred_fallthru
        _
      // Predicated region
      $region21: #{tpu_custom_call.1} parent=11 // pred_check
        %p301 = pneg %p107
      $region22: #{tpu_custom_call.1} parent=11 // pred_check_branch
        %303 = sbr.rel (%p301) target = $region24
      $region23: #{tpu_custom_call.1} parent=11 // pred_region
        _
      $region24: #{tpu_custom_call.1} parent=11 // pred_fallthru
        _
      // Predicated region
      $region25: #{tpu_custom_call.1} parent=11 // pred_check
        %p304 = pneg %p128
      $region26: #{tpu_custom_call.1} parent=11 // pred_check_branch
        %306 = sbr.rel (%p304) target = $region28
      $region27: #{tpu_custom_call.1} parent=11 // pred_region
        _
      $region28: #{tpu_custom_call.1} parent=11 // pred_fallthru
        _
      // Predicated region
      $region29: #{tpu_custom_call.1} parent=11 // pred_check
        %p307 = pneg %p149
      $region30: #{tpu_custom_call.1} parent=11 // pred_check_branch
        %309 = sbr.rel (%p307) target = $region32
      $region31: #{tpu_custom_call.1} parent=11 // pred_region
        _
      $region32: #{tpu_custom_call.1} parent=11 // pred_fallthru
        _
      // Predicated region
      $region33: #{tpu_custom_call.1} parent=11 // pred_check
        %p310 = pneg %p170
      $region34: #{tpu_custom_call.1} parent=11 // pred_check_branch
        %312 = sbr.rel (%p310) target = $region36
      $region35: #{tpu_custom_call.1} parent=11 // pred_region
        _
      $region36: #{tpu_custom_call.1} parent=11 // pred_fallthru
        _
      // Predicated region
      $region37: #{tpu_custom_call.1} parent=11 // pred_check
        %p313 = pneg %p191
      $region38: #{tpu_custom_call.1} parent=11 // pred_check_branch
        %315 = sbr.rel (%p313) target = $region40
      $region39: #{tpu_custom_call.1} parent=11 // pred_region
        _
      $region40: #{tpu_custom_call.1} parent=11 // pred_fallthru
        _
      // Predicated region
      $region41: #{tpu_custom_call.1} parent=11 // pred_check
        %p316 = pneg %p212
      $region42: #{tpu_custom_call.1} parent=11 // pred_check_branch
        %318 = sbr.rel (%p316) target = $region44
      $region43: #{tpu_custom_call.1} parent=11 // pred_region
        _
      $region44: #{tpu_custom_call.1} parent=11 // pred_fallthru
        _
      // Predicated region
      $region45: #{tpu_custom_call.1} parent=11 // pred_check
        %p319 = pneg %p233
      $region46: #{tpu_custom_call.1} parent=11 // pred_check_branch
        %321 = sbr.rel (%p319) target = $region48
      $region47: #{tpu_custom_call.1} parent=11 // pred_region
        _
      $region48: #{tpu_custom_call.1} parent=11 // pred_fallthru
        _
      // Predicated region
      $region49: #{tpu_custom_call.1} parent=11 // pred_check
        %p322 = pneg %p254
      $region50: #{tpu_custom_call.1} parent=11 // pred_check_branch
        %324 = sbr.rel (%p322) target = $region52
      $region51: #{tpu_custom_call.1} parent=11 // pred_region
        _
      $region52: #{tpu_custom_call.1} parent=11 // pred_fallthru
        _
    $region12: #{tpu_custom_call.1} parent=5 // pred_fallthru
      _
    %p325 = scmp.lt.s32.totalorder %s18, 2
    // Predicated region
    $region53: #{tpu_custom_call.1} parent=5 // pred_check
      %p326 = pneg %p325
    $region54: #{tpu_custom_call.1} parent=5 // pred_check_branch
      %328 = sbr.rel (%p326) target = $region56
    $region55: #{tpu_custom_call.1} parent=5 // pred_region
      // Predicated region
      $region57: #{tpu_custom_call.1} parent=55 // pred_check
        %p329 = pneg %p59
      $region58: #{tpu_custom_call.1} parent=55 // pred_check_branch
        %331 = sbr.rel (%p329) target = $region60
      $region59: #{tpu_custom_call.1} parent=55 // pred_region
        %s332 = smul.u32 4, %s18
        %p333 = scmp.lt.s32.totalorder %s332, 7
        %s334 = scalar_select %p333, %s332, 7
        %s335 = smul.addr %s334, 8
        %s336 = scalar_lea.vmem %s1, %s335
        %s337 = smul.u32 4, %s18
      $region60: #{tpu_custom_call.1} parent=55 // pred_fallthru
        _
    $region56: #{tpu_custom_call.1} parent=5 // pred_fallthru
      _
    %p338 = scmp.le.s32.totalorder 1, %s18
    %p339 = scmp.lt.s32.totalorder %s18, 3
    %p340 = pnand %p338, %p339
    %p341 = pneg %p340
    // Predicated region
    $region61: #{tpu_custom_call.1} parent=5 // pred_check
      _
    $region62: #{tpu_custom_call.1} parent=5 // pred_check_branch
      %343 = sbr.rel (%p340) target = $region64
    $region63: #{tpu_custom_call.1} parent=5 // pred_region
      %s344 = ssub.s32 %s18, 1
      %p345 = pneg %p39
      %p346 = pneg %p36
      %s347 = smul.u32 4, %s23
      %p348 = scmp.lt.s32.totalorder %s347, 7
      %s349 = scalar_select %p348, %s347, 7
      %s350 = smul.addr %s349, 8
      %s351 = scalar_lea.vmem %s1, %s350
      %p352 = pneg %p65
      %p353 = pneg %p62
      %p354 = pneg %p86
      %p355 = pneg %p83
      %p356 = pneg %p107
      %p357 = pneg %p104
      %p358 = pneg %p128
      %p359 = pneg %p125
      %p360 = pneg %p149
      %p361 = pneg %p146
      %p362 = pneg %p170
      %p363 = pneg %p167
      %p364 = pneg %p191
      %p365 = pneg %p188
      %p366 = pneg %p212
      %p367 = pneg %p209
      %p368 = pneg %p233
      %p369 = pneg %p230
      %p370 = pneg %p254
      %p371 = pneg %p251
      %p372 = pneg %p280
      %p373 = pneg %p277
      %s374 = smul.u32 4, %s23
      %p375 = scmp.lt.s32.totalorder %s374, 7
      %s376 = scalar_select %p375, %s374, 7
      %s377 = smul.addr %s376, 8
      %s378 = scalar_lea.vmem %s11, %s377
      %s379 = smul.u32 4, %s23
      %p380 = scmp.lt.s32.totalorder %s379, 7
      %s381 = scalar_select %p380, %s379, 7
      %s382 = smul.addr %s381, 8
      %s383 = scalar_lea.vmem %s1, %s382
      %s384 = smul.u32 4, %s23
      %s385 = smul.u32 4, %s23
      %p386 = scmp.lt.s32.totalorder %s385, 7
      %s387 = scalar_select %p386, %s385, 7
      %s388 = smul.addr %s387, 8
      %s389 = scalar_lea.vmem %s11, %s388
      %s390 = smul.u32 4, %s23
      %s392 = sld [smem:[#allocation2]]
      %v393 = vld [vmem:[%s383] sm:$0xff]
      %v394 = vld [vmem:[%s383 + $0x8] sm:$0xff]
      %v395 = vld [vmem:[%s383 + $0x10] sm:$0xff]
      %v396 = vld [vmem:[%s383 + $0x18] sm:$0xff]
      %v397 = vpack.c.bf16 %v394, %v393
      %v398 = vpack.c.bf16 %v396, %v395
      %v399 = vld [vmem:[%s2] sm:$0xf]
      %v400 = vld [vmem:[%s2 + $0x4] sm:$0xf]
      %v401 = vld [vmem:[%s3] sm:$0x1]
      %v402 = vstv %s392
      %v403 = vmul.f32 %v402, %v401
      %v404 = vld [vmem:[%s4] sm:$0x1]
      %v405 = vadd.f32 %v403, %v404
      %v407 = vlaneseq
      %v408 = vshrl.u32 %v407, 7
      %v409 = vsub.s32 0, %v408
      %v410 = vrot.slane %v405, %v409
      %v414 = vunpack.c.l.b16 %v399
      %v415 = vunpack.c.l.b16 %v400
      %v416 = vpack.c.b16 %v415, %v414
      %vm418 = vcmask 130048
      %v420 = vsel %vm418, %v397, 0
      %v423 = vsel %vm418, %v398, 0
      %425 = vmatprep.subr.bf16.mxu0 0
      %426 = vmatpush1.bf16.msra.mxu0 %v416
      %427 = vmatprep.subr.bf16.mxu0 0
      %428 = vmatpush1.bf16.msra.mxu0 0
      %429 = vmatprep.subr.bf16.mxu0 0
      %430 = vmatpush1.bf16.msra.mxu0 0
      %431 = vmatprep.subr.bf16.mxu0 0
      %432 = vmatpush1.bf16.msra.mxu0 0
      %433 = vmatprep.subr.bf16.mxu0 0
      %434 = vmatpush1.bf16.msra.mxu0 0
      %435 = vmatprep.subr.bf16.mxu0 0
      %436 = vmatpush1.bf16.msra.mxu0 0
      %437 = vmatprep.subr.bf16.mxu0 0
      %438 = vmatpush1.bf16.msra.mxu0 0
      %439 = vmatprep.subr.bf16.mxu0 0
      %440 = vmatpush1.bf16.msra.mxu0 0
      %441 = vmatprep.subr.bf16.mxu0 0
      %442 = vmatpush1.bf16.msra.mxu0 0
      %443 = vmatprep.subr.bf16.mxu0 0
      %444 = vmatpush1.bf16.msra.mxu0 0
      %445 = vmatprep.subr.bf16.mxu0 0
      %446 = vmatpush1.bf16.msra.mxu0 0
      %447 = vmatprep.subr.bf16.mxu0 0
      %448 = vmatpush1.bf16.msra.mxu0 0
      %449 = vmatprep.subr.bf16.mxu0 0
      %450 = vmatpush1.bf16.msra.mxu0 0
      %451 = vmatprep.subr.bf16.mxu0 0
      %452 = vmatpush1.bf16.msra.mxu0 0
      %453 = vmatprep.subr.bf16.mxu0 0
      %454 = vmatpush1.bf16.msra.mxu0 0
      %455 = vmatprep.subr.bf16.mxu0 0
      %456 = vmatpush1.bf16.msra.mxu0 0
      %457 = vmatprep.mubr.bf16.mxu0 0
      %458 = vmatmul.mubr.bf16.gmra.mrb[0].mxu0 %v420
      %v459 = vpop.f32.mrb[0].mxu0
      %v460 = vadd.f32 %v410, %v459
      %v461 = vpop.f32.mrb[0].mxu0
      %v462 = vpop.f32.mrb[0].mxu0
      %v463 = vadd.f32 %v410, %v462
      %v464 = vpop.f32.mrb[0].mxu0
      %465 = vmatprep.mubr.bf16.mxu0 0
      %466 = vmatmul.mubr.bf16.gmra.mrb[0].mxu0 %v423
      %v467 = vpop.f32.mrb[0].mxu0
      %v468 = vadd.f32 %v410, %v467
      %v469 = vpop.f32.mrb[0].mxu0
      %v470 = vpop.f32.mrb[0].mxu0
      %v471 = vadd.f32 %v410, %v470
      %v472 = vpop.f32.mrb[0].mxu0
      %473 = vdwg.mxu0
      %v474 = vmax.f32 %v460, 0.0
      %v475 = vmax.f32 %v463, 0.0
      %v476 = vmax.f32 %v468, 0.0
      %v477 = vmax.f32 %v471, 0.0
      %v478 = vpack.c.bf16 %v475, %v474
      %v479 = vpack.c.bf16 %v477, %v476
      %v480 = vld [vmem:[%s5] sm:$0xf]
      %v481 = vld [vmem:[%s5 + $0x4] sm:$0xf]
      %v482 = vld [vmem:[%s5 + $0x8] sm:$0xf]
      %v483 = vld [vmem:[%s5 + $0xc] sm:$0xf]
      %v484 = vld [vmem:[%s5 + $0x10] sm:$0xf]
      %v485 = vld [vmem:[%s5 + $0x14] sm:$0xf]
      %v486 = vld [vmem:[%s5 + $0x18] sm:$0xf]
      %v487 = vld [vmem:[%s5 + $0x1c] sm:$0xf]
      %v488 = vld [vmem:[%s5 + $0x20] sm:$0xf]
      %v489 = vld [vmem:[%s5 + $0x24] sm:$0xf]
      %v490 = vld [vmem:[%s5 + $0x28] sm:$0xf]
      %v491 = vld [vmem:[%s5 + $0x2c] sm:$0xf]
      %v492 = vld [vmem:[%s5 + $0x30] sm:$0xf]
      %v493 = vld [vmem:[%s5 + $0x34] sm:$0xf]
      %v494 = vld [vmem:[%s5 + $0x38] sm:$0xf]
      %v495 = vld [vmem:[%s5 + $0x3c] sm:$0xf]
      %v496 = vld [vmem:[%s6] sm:$0x1]
      %v498 = vlaneseq
      %v499 = vshrl.u32 %v498, 7
      %v500 = vsub.s32 0, %v499
      %v501 = vrot.slane %v496, %v500
      %v519 = vunpack.c.l.b16 %v480
      %v520 = vunpack.c.l.b16 %v481
      %v521 = vunpack.c.l.b16 %v482
      %v522 = vunpack.c.l.b16 %v483
      %v523 = vunpack.c.l.b16 %v484
      %v524 = vunpack.c.l.b16 %v485
      %v525 = vunpack.c.l.b16 %v486
      %v526 = vunpack.c.l.b16 %v487
      %v527 = vunpack.c.l.b16 %v488
      %v528 = vunpack.c.l.b16 %v489
      %v529 = vunpack.c.l.b16 %v490
      %v530 = vunpack.c.l.b16 %v491
      %v531 = vunpack.c.l.b16 %v492
      %v532 = vunpack.c.l.b16 %v493
      %v533 = vunpack.c.l.b16 %v494
      %v534 = vunpack.c.l.b16 %v495
      %v535 = vpack.c.b16 %v520, %v519
      %v536 = vpack.c.b16 %v522, %v521
      %v537 = vpack.c.b16 %v524, %v523
      %v538 = vpack.c.b16 %v526, %v525
      %v539 = vpack.c.b16 %v528, %v527
      %v540 = vpack.c.b16 %v530, %v529
      %v541 = vpack.c.b16 %v532, %v531
      %v542 = vpack.c.b16 %v534, %v533
      %551 = vmatprep.subr.bf16.mxu0 0
      %552 = vmatpush1.bf16.msra.mxu0 %v535
      %553 = vmatprep.subr.bf16.mxu0 0
      %554 = vmatpush1.bf16.msra.mxu0 %v536
      %555 = vmatprep.subr.bf16.mxu0 0
      %556 = vmatpush1.bf16.msra.mxu0 %v537
      %557 = vmatprep.subr.bf16.mxu0 0
      %558 = vmatpush1.bf16.msra.mxu0 %v538
      %559 = vmatprep.subr.bf16.mxu0 0
      %560 = vmatpush1.bf16.msra.mxu0 %v539
      %561 = vmatprep.subr.bf16.mxu0 0
      %562 = vmatpush1.bf16.msra.mxu0 %v540
      %563 = vmatprep.subr.bf16.mxu0 0
      %564 = vmatpush1.bf16.msra.mxu0 %v541
      %565 = vmatprep.subr.bf16.mxu0 0
      %566 = vmatpush1.bf16.msra.mxu0 %v542
      %567 = vmatprep.subr.bf16.mxu0 0
      %568 = vmatpush1.bf16.msra.mxu0 0
      %569 = vmatprep.subr.bf16.mxu0 0
      %570 = vmatpush1.bf16.msra.mxu0 0
      %571 = vmatprep.subr.bf16.mxu0 0
      %572 = vmatpush1.bf16.msra.mxu0 0
      %573 = vmatprep.subr.bf16.mxu0 0
      %574 = vmatpush1.bf16.msra.mxu0 0
      %575 = vmatprep.subr.bf16.mxu0 0
      %576 = vmatpush1.bf16.msra.mxu0 0
      %577 = vmatprep.subr.bf16.mxu0 0
      %578 = vmatpush1.bf16.msra.mxu0 0
      %579 = vmatprep.subr.bf16.mxu0 0
      %580 = vmatpush1.bf16.msra.mxu0 0
      %581 = vmatprep.subr.bf16.mxu0 0
      %582 = vmatpush1.bf16.msra.mxu0 0
      %583 = vmatprep.mubr.bf16.mxu0 0
      %584 = vmatmul.mubr.bf16.gmra.mrb[0].mxu0 %v478
      %v585 = vpop.f32.mrb[0].mxu0
      %v586 = vadd.f32 %v501, %v585
      %v587 = vpop.f32.mrb[0].mxu0
      %v588 = vpop.f32.mrb[0].mxu0
      %v589 = vadd.f32 %v501, %v588
      %v590 = vpop.f32.mrb[0].mxu0
      %591 = vmatprep.mubr.bf16.mxu0 0
      %592 = vmatmul.mubr.bf16.gmra.mrb[0].mxu0 %v479
      %v593 = vpop.f32.mrb[0].mxu0
      %v594 = vadd.f32 %v501, %v593
      %v595 = vpop.f32.mrb[0].mxu0
      %v596 = vpop.f32.mrb[0].mxu0
      %v597 = vadd.f32 %v501, %v596
      %v598 = vpop.f32.mrb[0].mxu0
      %599 = vdwg.mxu0
      %v600 = vmax.f32 %v586, 0.0
      %v601 = vmax.f32 %v589, 0.0
      %v602 = vmax.f32 %v594, 0.0
      %v603 = vmax.f32 %v597, 0.0
      %v604 = vpack.c.bf16 %v601, %v600
      %v605 = vpack.c.bf16 %v603, %v602
      %v606 = vld [vmem:[%s7] sm:$0xf]
      %v607 = vld [vmem:[%s7 + $0x4] sm:$0xf]
      %v608 = vld [vmem:[%s7 + $0x8] sm:$0xf]
      %v609 = vld [vmem:[%s7 + $0xc] sm:$0xf]
      %v610 = vld [vmem:[%s7 + $0x10] sm:$0xf]
      %v611 = vld [vmem:[%s7 + $0x14] sm:$0xf]
      %v612 = vld [vmem:[%s7 + $0x18] sm:$0xf]
      %v613 = vld [vmem:[%s7 + $0x1c] sm:$0xf]
      %v614 = vld [vmem:[%s7 + $0x20] sm:$0xf]
      %v615 = vld [vmem:[%s7 + $0x24] sm:$0xf]
      %v616 = vld [vmem:[%s7 + $0x28] sm:$0xf]
      %v617 = vld [vmem:[%s7 + $0x2c] sm:$0xf]
      %v618 = vld [vmem:[%s7 + $0x30] sm:$0xf]
      %v619 = vld [vmem:[%s7 + $0x34] sm:$0xf]
      %v620 = vld [vmem:[%s7 + $0x38] sm:$0xf]
      %v621 = vld [vmem:[%s7 + $0x3c] sm:$0xf]
      %v622 = vld [vmem:[%s8] sm:$0x1]
      %v624 = vlaneseq
      %v625 = vshrl.u32 %v624, 7
      %v626 = vsub.s32 0, %v625
      %v627 = vrot.slane %v622, %v626
      %v645 = vunpack.c.l.b16 %v606
      %v646 = vunpack.c.l.b16 %v607
      %v647 = vunpack.c.l.b16 %v608
      %v648 = vunpack.c.l.b16 %v609
      %v649 = vunpack.c.l.b16 %v610
      %v650 = vunpack.c.l.b16 %v611
      %v651 = vunpack.c.l.b16 %v612
      %v652 = vunpack.c.l.b16 %v613
      %v653 = vunpack.c.l.b16 %v614
      %v654 = vunpack.c.l.b16 %v615
      %v655 = vunpack.c.l.b16 %v616
      %v656 = vunpack.c.l.b16 %v617
      %v657 = vunpack.c.l.b16 %v618
      %v658 = vunpack.c.l.b16 %v619
      %v659 = vunpack.c.l.b16 %v620
      %v660 = vunpack.c.l.b16 %v621
      %v661 = vpack.c.b16 %v646, %v645
      %v662 = vpack.c.b16 %v648, %v647
      %v663 = vpack.c.b16 %v650, %v649
      %v664 = vpack.c.b16 %v652, %v651
      %v665 = vpack.c.b16 %v654, %v653
      %v666 = vpack.c.b16 %v656, %v655
      %v667 = vpack.c.b16 %v658, %v657
      %v668 = vpack.c.b16 %v660, %v659
      %677 = vmatprep.subr.bf16.mxu0 0
      %678 = vmatpush1.bf16.msra.mxu0 %v661
      %679 = vmatprep.subr.bf16.mxu0 0
      %680 = vmatpush1.bf16.msra.mxu0 %v662
      %681 = vmatprep.subr.bf16.mxu0 0
      %682 = vmatpush1.bf16.msra.mxu0 %v663
      %683 = vmatprep.subr.bf16.mxu0 0
      %684 = vmatpush1.bf16.msra.mxu0 %v664
      %685 = vmatprep.subr.bf16.mxu0 0
      %686 = vmatpush1.bf16.msra.mxu0 %v665
      %687 = vmatprep.subr.bf16.mxu0 0
      %688 = vmatpush1.bf16.msra.mxu0 %v666
      %689 = vmatprep.subr.bf16.mxu0 0
      %690 = vmatpush1.bf16.msra.mxu0 %v667
      %691 = vmatprep.subr.bf16.mxu0 0
      %692 = vmatpush1.bf16.msra.mxu0 %v668
      %693 = vmatprep.subr.bf16.mxu0 0
      %694 = vmatpush1.bf16.msra.mxu0 0
      %695 = vmatprep.subr.bf16.mxu0 0
      %696 = vmatpush1.bf16.msra.mxu0 0
      %697 = vmatprep.subr.bf16.mxu0 0
      %698 = vmatpush1.bf16.msra.mxu0 0
      %699 = vmatprep.subr.bf16.mxu0 0
      %700 = vmatpush1.bf16.msra.mxu0 0
      %701 = vmatprep.subr.bf16.mxu0 0
      %702 = vmatpush1.bf16.msra.mxu0 0
      %703 = vmatprep.subr.bf16.mxu0 0
      %704 = vmatpush1.bf16.msra.mxu0 0
      %705 = vmatprep.subr.bf16.mxu0 0
      %706 = vmatpush1.bf16.msra.mxu0 0
      %707 = vmatprep.subr.bf16.mxu0 0
      %708 = vmatpush1.bf16.msra.mxu0 0
      %709 = vmatprep.mubr.bf16.mxu0 0
      %710 = vmatmul.mubr.bf16.gmra.mrb[0].mxu0 %v604
      %v711 = vpop.f32.mrb[0].mxu0
      %v712 = vadd.f32 %v627, %v711
      %v713 = vpop.f32.mrb[0].mxu0
      %v714 = vpop.f32.mrb[0].mxu0
      %v715 = vadd.f32 %v627, %v714
      %v716 = vpop.f32.mrb[0].mxu0
      %717 = vmatprep.mubr.bf16.mxu0 0
      %718 = vmatmul.mubr.bf16.gmra.mrb[0].mxu0 %v605
      %v719 = vpop.f32.mrb[0].mxu0
      %v720 = vadd.f32 %v627, %v719
      %v721 = vpop.f32.mrb[0].mxu0
      %v722 = vpop.f32.mrb[0].mxu0
      %v723 = vadd.f32 %v627, %v722
      %v724 = vpop.f32.mrb[0].mxu0
      %725 = vdwg.mxu0
      %v726 = vmax.f32 %v712, 0.0
      %v727 = vmax.f32 %v715, 0.0
      %v728 = vmax.f32 %v720, 0.0
      %v729 = vmax.f32 %v723, 0.0
      %v730 = vpack.c.bf16 %v727, %v726
      %v731 = vpack.c.bf16 %v729, %v728
      %v732 = vld [vmem:[%s9] sm:$0xf]
      %v733 = vld [vmem:[%s9 + $0x4] sm:$0xf]
      %v734 = vld [vmem:[%s9 + $0x8] sm:$0xf]
      %v735 = vld [vmem:[%s9 + $0xc] sm:$0xf]
      %v736 = vld [vmem:[%s9 + $0x10] sm:$0xf]
      %v737 = vld [vmem:[%s9 + $0x14] sm:$0xf]
      %v738 = vld [vmem:[%s9 + $0x18] sm:$0xf]
      %v739 = vld [vmem:[%s9 + $0x1c] sm:$0xf]
      %v740 = vld [vmem:[%s9 + $0x20] sm:$0xf]
      %v741 = vld [vmem:[%s9 + $0x24] sm:$0xf]
      %v742 = vld [vmem:[%s9 + $0x28] sm:$0xf]
      %v743 = vld [vmem:[%s9 + $0x2c] sm:$0xf]
      %v744 = vld [vmem:[%s9 + $0x30] sm:$0xf]
      %v745 = vld [vmem:[%s9 + $0x34] sm:$0xf]
      %v746 = vld [vmem:[%s9 + $0x38] sm:$0xf]
      %v747 = vld [vmem:[%s9 + $0x3c] sm:$0xf]
      %v748 = vld [vmem:[%s10] sm:$0x1]
      %v750 = vlaneseq
      %v751 = vshrl.u32 %v750, 7
      %v752 = vsub.s32 0, %v751
      %v753 = vrot.slane %v748, %v752
      %v771 = vunpack.c.l.b16 %v732
      %v772 = vunpack.c.l.b16 %v733
      %v773 = vunpack.c.l.b16 %v734
      %v774 = vunpack.c.l.b16 %v735
      %v775 = vunpack.c.l.b16 %v736
      %v776 = vunpack.c.l.b16 %v737
      %v777 = vunpack.c.l.b16 %v738
      %v778 = vunpack.c.l.b16 %v739
      %v779 = vunpack.c.l.b16 %v740
      %v780 = vunpack.c.l.b16 %v741
      %v781 = vunpack.c.l.b16 %v742
      %v782 = vunpack.c.l.b16 %v743
      %v783 = vunpack.c.l.b16 %v744
      %v784 = vunpack.c.l.b16 %v745
      %v785 = vunpack.c.l.b16 %v746
      %v786 = vunpack.c.l.b16 %v747
      %v787 = vpack.c.b16 %v772, %v771
      %v788 = vpack.c.b16 %v774, %v773
      %v789 = vpack.c.b16 %v776, %v775
      %v790 = vpack.c.b16 %v778, %v777
      %v791 = vpack.c.b16 %v780, %v779
      %v792 = vpack.c.b16 %v782, %v781
      %v793 = vpack.c.b16 %v784, %v783
      %v794 = vpack.c.b16 %v786, %v785
      %803 = vmatprep.subr.bf16.mxu0 0
      %804 = vmatpush1.bf16.msra.mxu0 %v787
      %805 = vmatprep.subr.bf16.mxu0 0
      %806 = vmatpush1.bf16.msra.mxu0 %v788
      %807 = vmatprep.subr.bf16.mxu0 0
      %808 = vmatpush1.bf16.msra.mxu0 %v789
      %809 = vmatprep.subr.bf16.mxu0 0
      %810 = vmatpush1.bf16.msra.mxu0 %v790
      %811 = vmatprep.subr.bf16.mxu0 0
      %812 = vmatpush1.bf16.msra.mxu0 %v791
      %813 = vmatprep.subr.bf16.mxu0 0
      %814 = vmatpush1.bf16.msra.mxu0 %v792
      %815 = vmatprep.subr.bf16.mxu0 0
      %816 = vmatpush1.bf16.msra.mxu0 %v793
      %817 = vmatprep.subr.bf16.mxu0 0
      %818 = vmatpush1.bf16.msra.mxu0 %v794
      %819 = vmatprep.subr.bf16.mxu0 0
      %820 = vmatpush1.bf16.msra.mxu0 0
      %821 = vmatprep.subr.bf16.mxu0 0
      %822 = vmatpush1.bf16.msra.mxu0 0
      %823 = vmatprep.subr.bf16.mxu0 0
      %824 = vmatpush1.bf16.msra.mxu0 0
      %825 = vmatprep.subr.bf16.mxu0 0
      %826 = vmatpush1.bf16.msra.mxu0 0
      %827 = vmatprep.subr.bf16.mxu0 0
      %828 = vmatpush1.bf16.msra.mxu0 0
      %829 = vmatprep.subr.bf16.mxu0 0
      %830 = vmatpush1.bf16.msra.mxu0 0
      %831 = vmatprep.subr.bf16.mxu0 0
      %832 = vmatpush1.bf16.msra.mxu0 0
      %833 = vmatprep.subr.bf16.mxu0 0
      %834 = vmatpush1.bf16.msra.mxu0 0
      %835 = vmatprep.mubr.bf16.mxu0 0
      %836 = vmatmul.mubr.bf16.gmra.mrb[0].mxu0 %v730
      %v837 = vpop.f32.mrb[0].mxu0
      %v838 = vadd.f32 %v753, %v837
      %v839 = vpop.f32.mrb[0].mxu0
      %v840 = vpop.f32.mrb[0].mxu0
      %v841 = vadd.f32 %v753, %v840
      %v842 = vpop.f32.mrb[0].mxu0
      %843 = vmatprep.mubr.bf16.mxu0 0
      %844 = vmatmul.mubr.bf16.gmra.mrb[0].mxu0 %v731
      %v845 = vpop.f32.mrb[0].mxu0
      %v846 = vadd.f32 %v753, %v845
      %v847 = vpop.f32.mrb[0].mxu0
      %v848 = vpop.f32.mrb[0].mxu0
      %v849 = vadd.f32 %v753, %v848
      %v850 = vpop.f32.mrb[0].mxu0
      %851 = vdwg.mxu0
      %852 = vst.msk [vmem:[%s389] sm:$0xff] %vm418, %v838
      %853 = vst.msk [vmem:[%s389 + $0x8] sm:$0xff] %vm418, %v841
      %854 = vst.msk [vmem:[%s389 + $0x10] sm:$0xff] %vm418, %v846
      %855 = vst.msk [vmem:[%s389 + $0x18] sm:$0xff] %vm418, %v849
      %s856 = smul.u32 4, %s23
      %p857 = scmp.lt.s32.totalorder %s856, 7
      %s858 = scalar_select %p857, %s856, 7
      %s859 = smul.addr %s858, 8
      %s860 = scalar_lea.vmem %s11, %s859
      // Predicated region
      $region65: #{tpu_custom_call.1} parent=63 // pred_check
        %p861 = pneg %p277
      $region66: #{tpu_custom_call.1} parent=63 // pred_check_branch
        %863 = sbr.rel (%p861) target = $region68
      $region67: #{tpu_custom_call.1} parent=63 // pred_region
        %s864 = smul.u32 4, %s23
      $region68: #{tpu_custom_call.1} parent=63 // pred_fallthru
        _
    $region64: #{tpu_custom_call.1} parent=5 // pred_fallthru
      _
    %p865 = scmp.le.s32.totalorder 2, %s18
    // Predicated region
    $region69: #{tpu_custom_call.1} parent=5 // pred_check
      %p866 = pneg %p865
    $region70: #{tpu_custom_call.1} parent=5 // pred_check_branch
      %868 = sbr.rel (%p866) target = $region72
    $region71: #{tpu_custom_call.1} parent=5 // pred_region
      %s869 = ssub.s32 %s18, 2
      // Predicated region
      $region73: #{tpu_custom_call.1} parent=71 // pred_check
        %p870 = pneg %p283
      $region74: #{tpu_custom_call.1} parent=71 // pred_check_branch
        %872 = sbr.rel (%p870) target = $region76
      $region75: #{tpu_custom_call.1} parent=71 // pred_region
        %s873 = smul.u32 4, %s24
        %p874 = scmp.lt.s32.totalorder %s873, 7
        %s875 = scalar_select %p874, %s873, 7
        %s876 = smul.addr %s875, 8
        %s877 = scalar_lea.vmem %s11, %s876
      $region76: #{tpu_custom_call.1} parent=71 // pred_fallthru
        _
    $region72: #{tpu_custom_call.1} parent=5 // pred_fallthru
      _
  $region6: #{tpu_custom_call.1} parent=0 // loop_footer
    %s22 = sadd.s32 1, %s18
  $region7: #{tpu_custom_call.1} parent=0 // loop_footer_branch
    %17 = sbr.rel target = $region3
  $region8: #{tpu_custom_call.1} parent=0 // loop_exit
    _

</llo_original>
